<compile_context>
chip_gen: v6e
topology: v6e:2x2x1
jax: 0.10.0
libtpu: 0.0.40
codegen_flags: <defaults>
</compile_context>

<pallas_src>
import jax
import jax.numpy as jnp
from jax.experimental import pallas as pl
from jax.experimental.pallas import tpu as pltpu


LN_EPS = 1e-5  # PyTorch nn.LayerNorm default


def channel_attention_kernel(x_ref, w1_ref, b1_ref, wc1_ref, wc2_ref,
                             w2_ref, b2_ref, lng_ref, lnb_ref, gam_ref,
                             o_ref):
    # x: (TM, D) tile of tokens; elementwise / LN math kept in f32.
    x = x_ref[...].astype(jnp.float32)

    # ---- ChannelAttentionBlock.fc1 + ReLU : (TM, D) @ (D, R) + b1 ----
    # w1 is pre-cast to bf16 in the wrapper; bf16 MXU path, f32 accumulate.
    h = jnp.dot(x.astype(jnp.bfloat16), w1_ref[...],
                preferred_element_type=jnp.float32) + b1_ref[...]
    h = jnp.maximum(h, 0.0)

    # ---- ChannelAttentionLayer: sigmoid(W2 @ relu(W1 @ h)) gate, elementwise mul ----
    # r x r (8x8) dots are tiny and fully hidden under HBM streaming; keep f32.
    y = jnp.dot(h, wc1_ref[...], preferred_element_type=jnp.float32)
    y = jnp.maximum(y, 0.0)
    y = jnp.dot(y, wc2_ref[...], preferred_element_type=jnp.float32)
    y = jax.nn.sigmoid(y)
    h = h * y

    # ---- fc2 : (TM, R) @ (R, D) + b2 ----
    # K=8 contraction does not average bf16 rounding, so keep f32 (negligible cost).
    out1 = jnp.dot(h, w2_ref[...], preferred_element_type=jnp.float32) + b2_ref[...]

    # ---- folded residual: x + (gamma1*out1 + gamma2*x) = (1+gamma2)*x + gamma1*out1 ----
    g1 = gam_ref[0]
    g2 = gam_ref[1]
    z = (1.0 + g2) * x + g1 * out1

    # ---- dropout (identity in eval) + LayerNorm over d_model ----
    # Two-pass variance: stable even when |mean| >> std.
    inv_d = 1.0 / z.shape[-1]
    mean = jnp.sum(z, axis=-1, keepdims=True) * inv_d
    zc = z - mean
    var = jnp.sum(zc * zc, axis=-1, keepdims=True) * inv_d
    zn = zc * jax.lax.rsqrt(var + LN_EPS)
    o_ref[...] = (zn * lng_ref[...] + lnb_ref[...]).astype(o_ref.dtype)


def _round_up(x, m):
    return ((x + m - 1) // m) * m


def _choose_tile(n, tm_cap=2048):
    """Row-tile size: ~1 MiB-class tiles, even >=2-step grid, multiple of 8."""
    if n <= 8:
        return n                       # single full block (block == full dim)
    steps = max(2, pl.cdiv(n, tm_cap))
    if steps % 2:
        steps += 1                     # even step count -> balanced v7x TCs
    tm = _round_up(pl.cdiv(n, steps), 8)
    return min(tm, _round_up(n, 8))


def channel_attention_forward(queries, params, *, tm_cap=2048):
    """queries: (bs, ns, d_model). Output has the same dtype as the input."""
    bs, ns, d = queries.shape
    r = params["w1"].shape[1]
    n = bs * ns

    x2d = queries.reshape(n, d)        # no padding copy: ragged last block is masked

    tm_eff = _choose_tile(n, tm_cap)
    grid = pl.cdiv(n, tm_eff)

    # One-time pre-cast of the fc1 weight (avoids a per-step VPU cast in-kernel).
    w1_bf16 = params["w1"].astype(jnp.bfloat16)

    full = lambda shape: pl.BlockSpec(shape, lambda i: tuple(0 for _ in shape))

    # VMEM budget from the actual footprint: 2x double-buffered (tm, d) tiles
    # (in + out) plus a few (tm, d) f32 intermediates and ~9 KiB of weights.
    itemsize = jnp.dtype(queries.dtype).itemsize
    tile_bytes = tm_eff * d * itemsize
    vmem_budget = int(min(32 * 1024 * 1024, max(16 * 1024 * 1024, 12 * tile_bytes)))

    out2d = pl.pallas_call(
        channel_attention_kernel,
        out_shape=jax.ShapeDtypeStruct((n, d), queries.dtype),
        grid_spec=pltpu.PrefetchScalarGridSpec(
            num_scalar_prefetch=0,
            grid=(grid,),
            in_specs=[
                pl.BlockSpec((tm_eff, d), lambda i: (i, 0)),        # x tile
                full((d, r)),                                       # fc1 weight (bf16)
                full((1, r)),                                       # fc1 bias
                full((r, r)),                                       # ca fc[0] weight
                full((r, r)),                                       # ca fc[2] weight
                full((r, d)),                                       # fc2 weight (f32)
                full((1, d)),                                       # fc2 bias
                full((1, d)),                                       # layer_norm gamma
                full((1, d)),                                       # layer_norm beta
                pl.BlockSpec(memory_space=pltpu.MemorySpace.SMEM),  # [gamma1, gamma2]
            ],
            out_specs=pl.BlockSpec((tm_eff, d), lambda i: (i, 0)),
        ),
        compiler_params=pltpu.CompilerParams(
            dimension_semantics=("parallel",),
            vmem_limit_bytes=vmem_budget),
    )(x2d, w1_bf16, params["b1"], params["wc1"], params["wc2"],
      params["w2"], params["b2"], params["ln_g"], params["ln_b"],
      params["gammas"])

    return out2d.reshape(bs, ns, d)


def make_params(key, d_model, reduction=16):
    r = d_model // reduction
    ks = jax.random.split(key, 6)
    scale = lambda fan_in, fan_out: jnp.sqrt(2.0 / (fan_in + fan_out))  # xavier-normal-ish
    return {
        # stored as (in, out): y = x @ W + b
        "w1": (jax.random.normal(ks[0], (d_model, r), jnp.float32) * scale(d_model, r)),
        "b1": (jax.random.normal(ks[1], (1, r), jnp.float32) * 0.01),
        "wc1": (jax.random.normal(ks[2], (r, r), jnp.float32) * scale(r, r)),
        "wc2": (jax.random.normal(ks[3], (r, r), jnp.float32) * scale(r, r)),
        "w2": (jax.random.normal(ks[4], (r, d_model), jnp.float32) * scale(r, d_model)),
        "b2": (jax.random.normal(ks[5], (1, d_model), jnp.float32) * 0.01),
        "ln_g": jnp.ones((1, d_model), jnp.float32),
        "ln_b": jnp.zeros((1, d_model), jnp.float32),
        "gammas": jnp.array([1.0, 1.0], jnp.float32),  # gamma1, gamma2 init to ones(1)
    }


def reference_forward(q, p):
    x = q.astype(jnp.float32)
    h = jnp.maximum(x @ p["w1"] + p["b1"], 0.0)
    y = jax.nn.sigmoid(jnp.maximum(h @ p["wc1"], 0.0) @ p["wc2"])
    h = h * y
    out1 = h @ p["w2"] + p["b2"]
    out = p["gammas"][0] * out1 + p["gammas"][1] * x
    z = x + out
    mean = jnp.mean(z, -1, keepdims=True)
    var = jnp.mean((z - mean) ** 2, -1, keepdims=True)
    return (z - mean) / jnp.sqrt(var + LN_EPS) * p["ln_g"] + p["ln_b"]


if __name__ == "__main__":
    d_model, d_k, d_v, h = 128, 16, 16, 8   # d_model // 16 = 8 channel bottleneck
    bs, ns = 2, 9                           # n = 18 rows -> 2-step grid + ragged last block

    key = jax.random.PRNGKey(0)
    k_x, k_p = jax.random.split(key)
    queries = jax.random.normal(k_x, (bs, ns, d_model), jnp.float32)
    params = make_params(k_p, d_model)

    out = channel_attention_forward(queries, params)
    out = jax.block_until_ready(out)

    ref = reference_forward(queries, params)
    assert out.shape == (bs, ns, d_model)
    # bf16 fc1 on the MXU (everything else f32) -> modest tolerance
    assert jnp.allclose(out, ref, atol=2e-2, rtol=2e-2), "mismatch vs JAX reference"
    assert bool(jnp.all(jnp.isfinite(out))), "non-finite output"

    print("KERNEL_OK")
</pallas_src>

<mosaic_0001>
module attributes {stable_mosaic.version = 11 : i64} {
  func.func @channel_attention_kernel(%arg0: i32, %arg1: memref<16x128xf32, #tpu.memory_space<vmem>>, %arg2: memref<128x8xbf16, #tpu.memory_space<vmem>>, %arg3: memref<1x8xf32, #tpu.memory_space<vmem>>, %arg4: memref<8x8xf32, #tpu.memory_space<vmem>>, %arg5: memref<8x8xf32, #tpu.memory_space<vmem>>, %arg6: memref<8x128xf32, #tpu.memory_space<vmem>>, %arg7: memref<1x128xf32, #tpu.memory_space<vmem>>, %arg8: memref<1x128xf32, #tpu.memory_space<vmem>>, %arg9: memref<1x128xf32, #tpu.memory_space<vmem>>, %arg10: memref<2xf32, #tpu.memory_space<smem>>, %arg11: memref<16x128xf32, #tpu.memory_space<vmem>>) attributes {dimension_semantics = [#tpu.dimension_semantics<parallel>], iteration_bounds = array<i64: 2>, scalar_prefetch = 0 : i64, scratch_operands = 0 : i64, tpu.core_type = #tpu.core_type<tc>, window_params = [{transform_indices = @transform_0, window_bounds = array<i64: 16, 128>}, {pipeline_mode = #tpu.pipeline_mode<synchronous>, transform_indices = @transform_1, window_bounds = array<i64: 128, 8>}, {pipeline_mode = #tpu.pipeline_mode<synchronous>, transform_indices = @transform_2, window_bounds = array<i64: 1, 8>}, {pipeline_mode = #tpu.pipeline_mode<synchronous>, transform_indices = @transform_3, window_bounds = array<i64: 8, 8>}, {pipeline_mode = #tpu.pipeline_mode<synchronous>, transform_indices = @transform_4, window_bounds = array<i64: 8, 8>}, {pipeline_mode = #tpu.pipeline_mode<synchronous>, transform_indices = @transform_5, window_bounds = array<i64: 8, 128>}, {pipeline_mode = #tpu.pipeline_mode<synchronous>, transform_indices = @transform_6, window_bounds = array<i64: 1, 128>}, {pipeline_mode = #tpu.pipeline_mode<synchronous>, transform_indices = @transform_7, window_bounds = array<i64: 1, 128>}, {pipeline_mode = #tpu.pipeline_mode<synchronous>, transform_indices = @transform_8, window_bounds = array<i64: 1, 128>}, {transform_indices = @transform_9, window_bounds = array<i64: 2>}, {transform_indices = @transform_10, window_bounds = array<i64: 16, 128>}]} {
    %c0 = arith.constant 0 : index
    %c0_0 = arith.constant 0 : index
    %0 = vector.load %arg1[%c0, %c0_0] : memref<16x128xf32, #tpu.memory_space<vmem>>, vector<16x128xf32>
    %1 = arith.truncf %0 : vector<16x128xf32> to vector<16x128xbf16>
    %c0_1 = arith.constant 0 : index
    %c0_2 = arith.constant 0 : index
    %2 = vector.load %arg2[%c0_1, %c0_2] : memref<128x8xbf16, #tpu.memory_space<vmem>>, vector<128x8xbf16>
    %cst = arith.constant dense<0.000000e+00> : vector<16x8xf32>
    %3 = tpu.matmul %1, %2, %cst {dimension_numbers = #tpu.dot_dimension_numbers<[1], [0], [0], [1], [0, 0, 1, 1], [], []>} : vector<16x128xbf16>, vector<128x8xbf16>, vector<16x8xf32> -> vector<16x8xf32>
    %c0_3 = arith.constant 0 : index
    %c0_4 = arith.constant 0 : index
    %4 = vector.load %arg3[%c0_3, %c0_4] : memref<1x8xf32, #tpu.memory_space<vmem>>, vector<1x8xf32>
    %5 = vector.broadcast %4 : vector<1x8xf32> to vector<16x8xf32>
    %6 = arith.addf %3, %5 : vector<16x8xf32>
    %cst_5 = arith.constant 0.000000e+00 : f32
    %7 = vector.broadcast %cst_5 : f32 to vector<16x8xf32>
    %8 = arith.maximumf %6, %7 : vector<16x8xf32>
    %c0_6 = arith.constant 0 : index
    %c0_7 = arith.constant 0 : index
    %9 = vector.load %arg4[%c0_6, %c0_7] : memref<8x8xf32, #tpu.memory_space<vmem>>, vector<8x8xf32>
    %cst_8 = arith.constant dense<0.000000e+00> : vector<16x8xf32>
    %10 = tpu.matmul %8, %9, %cst_8 {dimension_numbers = #tpu.dot_dimension_numbers<[1], [0], [0], [1], [0, 0, 1, 1], [], []>} : vector<16x8xf32>, vector<8x8xf32>, vector<16x8xf32> -> vector<16x8xf32>
    %cst_9 = arith.constant 0.000000e+00 : f32
    %11 = vector.broadcast %cst_9 : f32 to vector<16x8xf32>
    %12 = arith.maximumf %10, %11 : vector<16x8xf32>
    %c0_10 = arith.constant 0 : index
    %c0_11 = arith.constant 0 : index
    %13 = vector.load %arg5[%c0_10, %c0_11] : memref<8x8xf32, #tpu.memory_space<vmem>>, vector<8x8xf32>
    %cst_12 = arith.constant dense<0.000000e+00> : vector<16x8xf32>
    %14 = tpu.matmul %12, %13, %cst_12 {dimension_numbers = #tpu.dot_dimension_numbers<[1], [0], [0], [1], [0, 0, 1, 1], [], []>} : vector<16x8xf32>, vector<8x8xf32>, vector<16x8xf32> -> vector<16x8xf32>
    %15 = arith.negf %14 : vector<16x8xf32>
    %16 = math.exp %15 : vector<16x8xf32>
    %cst_13 = arith.constant 1.000000e+00 : f32
    %17 = vector.broadcast %cst_13 : f32 to vector<16x8xf32>
    %18 = arith.addf %17, %16 : vector<16x8xf32>
    %19 = arith.divf %17, %18 : vector<16x8xf32>
    %20 = arith.mulf %8, %19 : vector<16x8xf32>
    %c0_14 = arith.constant 0 : index
    %c0_15 = arith.constant 0 : index
    %21 = vector.load %arg6[%c0_14, %c0_15] : memref<8x128xf32, #tpu.memory_space<vmem>>, vector<8x128xf32>
    %cst_16 = arith.constant dense<0.000000e+00> : vector<16x128xf32>
    %22 = tpu.matmul %20, %21, %cst_16 {dimension_numbers = #tpu.dot_dimension_numbers<[1], [0], [0], [1], [0, 0, 1, 1], [], []>} : vector<16x8xf32>, vector<8x128xf32>, vector<16x128xf32> -> vector<16x128xf32>
    %c0_17 = arith.constant 0 : index
    %c0_18 = arith.constant 0 : index
    %23 = vector.load %arg7[%c0_17, %c0_18] : memref<1x128xf32, #tpu.memory_space<vmem>>, vector<1x128xf32>
    %24 = vector.broadcast %23 : vector<1x128xf32> to vector<16x128xf32>
    %25 = arith.addf %22, %24 : vector<16x128xf32>
    %c0_19 = arith.constant 0 : index
    %26 = memref.load %arg10[%c0_19] : memref<2xf32, #tpu.memory_space<smem>>
    %c1 = arith.constant 1 : index
    %27 = memref.load %arg10[%c1] : memref<2xf32, #tpu.memory_space<smem>>
    %cst_20 = arith.constant 1.000000e+00 : f32
    %28 = arith.addf %cst_20, %27 : f32
    %29 = vector.broadcast %28 : f32 to vector<16x128xf32>
    %30 = arith.mulf %29, %0 : vector<16x128xf32>
    %31 = vector.broadcast %26 : f32 to vector<16x128xf32>
    %32 = arith.mulf %31, %25 : vector<16x128xf32>
    %33 = arith.addf %30, %32 : vector<16x128xf32>
    %cst_21 = arith.constant dense<0.000000e+00> : vector<16xf32>
    %34 = vector.multi_reduction <add>, %33, %cst_21 [1] : vector<16x128xf32> to vector<16xf32>
    %35 = vector.shape_cast %34 : vector<16xf32> to vector<16x1xf32>
    %cst_22 = arith.constant 7.812500e-03 : f32
    %36 = vector.broadcast %cst_22 : f32 to vector<16x1xf32>
    %37 = arith.mulf %35, %36 : vector<16x1xf32>
    %38 = vector.broadcast %37 : vector<16x1xf32> to vector<16x128xf32>
    %39 = arith.subf %33, %38 : vector<16x128xf32>
    %40 = arith.mulf %39, %39 : vector<16x128xf32>
    %cst_23 = arith.constant dense<0.000000e+00> : vector<16xf32>
    %41 = vector.multi_reduction <add>, %40, %cst_23 [1] : vector<16x128xf32> to vector<16xf32>
    %42 = vector.shape_cast %41 : vector<16xf32> to vector<16x1xf32>
    %cst_24 = arith.constant 7.812500e-03 : f32
    %43 = vector.broadcast %cst_24 : f32 to vector<16x1xf32>
    %44 = arith.mulf %42, %43 : vector<16x1xf32>
    %cst_25 = arith.constant 9.99999974E-6 : f32
    %45 = vector.broadcast %cst_25 : f32 to vector<16x1xf32>
    %46 = arith.addf %44, %45 : vector<16x1xf32>
    %47 = math.rsqrt %46 : vector<16x1xf32>
    %48 = vector.broadcast %47 : vector<16x1xf32> to vector<16x128xf32>
    %49 = arith.mulf %39, %48 : vector<16x128xf32>
    %c0_26 = arith.constant 0 : index
    %c0_27 = arith.constant 0 : index
    %50 = vector.load %arg8[%c0_26, %c0_27] : memref<1x128xf32, #tpu.memory_space<vmem>>, vector<1x128xf32>
    %51 = vector.broadcast %50 : vector<1x128xf32> to vector<16x128xf32>
    %52 = arith.mulf %49, %51 : vector<16x128xf32>
    %c0_28 = arith.constant 0 : index
    %c0_29 = arith.constant 0 : index
    %53 = vector.load %arg9[%c0_28, %c0_29] : memref<1x128xf32, #tpu.memory_space<vmem>>, vector<1x128xf32>
    %54 = vector.broadcast %53 : vector<1x128xf32> to vector<16x128xf32>
    %55 = arith.addf %52, %54 : vector<16x128xf32>
    %c0_30 = arith.constant 0 : index
    %c0_31 = arith.constant 0 : index
    %56 = vector.load %arg11[%c0_30, %c0_31] : memref<16x128xf32, #tpu.memory_space<vmem>>, vector<16x128xf32>
    tpu.vector_store %arg11[%c0_30, %c0_31], %55 {strides = array<i32>} : memref<16x128xf32, #tpu.memory_space<vmem>>, vector<16x128xf32>,
    return
  }
  func.func @transform_0(%arg0: i32) -> (i32, i32) {
    %c0_i32 = arith.constant 0 : i32
    %c0_i32_0 = arith.constant 0 : i32
    return %arg0, %c0_i32 : i32, i32
  }
  func.func @transform_1(%arg0: i32) -> (i32, i32) {
    %c0_i32 = arith.constant 0 : i32
    %c0_i32_0 = arith.constant 0 : i32
    %c0_i32_1 = arith.constant 0 : i32
    return %c0_i32, %c0_i32_0 : i32, i32
  }
  func.func @transform_2(%arg0: i32) -> (i32, i32) {
    %c0_i32 = arith.constant 0 : i32
    %c0_i32_0 = arith.constant 0 : i32
    %c0_i32_1 = arith.constant 0 : i32
    return %c0_i32, %c0_i32_0 : i32, i32
  }
  func.func @transform_3(%arg0: i32) -> (i32, i32) {
    %c0_i32 = arith.constant 0 : i32
    %c0_i32_0 = arith.constant 0 : i32
    %c0_i32_1 = arith.constant 0 : i32
    return %c0_i32, %c0_i32_0 : i32, i32
  }
  func.func @transform_4(%arg0: i32) -> (i32, i32) {
    %c0_i32 = arith.constant 0 : i32
    %c0_i32_0 = arith.constant 0 : i32
    %c0_i32_1 = arith.constant 0 : i32
    return %c0_i32, %c0_i32_0 : i32, i32
  }
  func.func @transform_5(%arg0: i32) -> (i32, i32) {
    %c0_i32 = arith.constant 0 : i32
    %c0_i32_0 = arith.constant 0 : i32
    %c0_i32_1 = arith.constant 0 : i32
    return %c0_i32, %c0_i32_0 : i32, i32
  }
  func.func @transform_6(%arg0: i32) -> (i32, i32) {
    %c0_i32 = arith.constant 0 : i32
    %c0_i32_0 = arith.constant 0 : i32
    %c0_i32_1 = arith.constant 0 : i32
    return %c0_i32, %c0_i32_0 : i32, i32
  }
  func.func @transform_7(%arg0: i32) -> (i32, i32) {
    %c0_i32 = arith.constant 0 : i32
    %c0_i32_0 = arith.constant 0 : i32
    %c0_i32_1 = arith.constant 0 : i32
    return %c0_i32, %c0_i32_0 : i32, i32
  }
  func.func @transform_8(%arg0: i32) -> (i32, i32) {
    %c0_i32 = arith.constant 0 : i32
    %c0_i32_0 = arith.constant 0 : i32
    %c0_i32_1 = arith.constant 0 : i32
    return %c0_i32, %c0_i32_0 : i32, i32
  }
  func.func @transform_9(%arg0: i32) -> i32 {
    %c0_i32 = arith.constant 0 : i32
    %c0_i32_0 = arith.constant 0 : i32
    return %c0_i32 : i32
  }
  func.func @transform_10(%arg0: i32) -> (i32, i32) {
    %c0_i32 = arith.constant 0 : i32
    %c0_i32_0 = arith.constant 0 : i32
    return %arg0, %c0_i32 : i32, i32
  }
}

</mosaic_0001>

<llo_original>
// kernel: tpu_custom_call.1
$region0: #{tpu_custom_call.1}
  #allocation0 [shape = 'u32[]', space=smem, size = 0x4, offset = 0x4, fixed_abs, tag = 'smem constant byte address 0x4 - core index']
  #allocation1 [shape = 'u32[144,128]{1,0:T(1,128)}', space=vmem, size = 0x12000, scoped, tag = 'internal scratch']
  %s0 = inlined_call_operand.vmem [shape: f32[18,128], index: 0, kind: input, shape index: {}]
  %s1 = inlined_call_operand.vmem [shape: bf16[128,8], index: 1, kind: input, shape index: {}]
  %s2 = inlined_call_operand.vmem [shape: f32[1,8], index: 2, kind: input, shape index: {}]
  %s3 = inlined_call_operand.vmem [shape: f32[8,8], index: 3, kind: input, shape index: {}]
  %s4 = inlined_call_operand.vmem [shape: f32[8,8], index: 4, kind: input, shape index: {}]
  %s5 = inlined_call_operand.vmem [shape: f32[8,128], index: 5, kind: input, shape index: {}]
  %s6 = inlined_call_operand.vmem [shape: f32[1,128], index: 6, kind: input, shape index: {}]
  %s7 = inlined_call_operand.vmem [shape: f32[1,128], index: 7, kind: input, shape index: {}]
  %s8 = inlined_call_operand.vmem [shape: f32[1,128], index: 8, kind: input, shape index: {}]
  %s9 = inlined_call_operand.vmem [shape: f32[2], index: 9, kind: input, shape index: {}]
  %s10 = inlined_call_operand.hbm [shape: f32[18,128], index: 10, kind: output, shape index: {}]
  %s11 = sld [smem:[#allocation0]]
  $region77: #{tpu_custom_call.1} parent=0
    _
  %s13 = ssub.s32 1, %s11
  %s14 = scalar_select 0, %s13, %s11
  $region1: #{tpu_custom_call.1} parent=0
    #allocation2 [shape = 'u8[512]{0}', space=smem, size = 0x200, scoped, tag = 'input window, operand 9, single buffered']
    #allocation3 [shape = 's32[2]{0}', space=sflag, size = 0x8, scoped, tag = 'scoped memory for tpu_custom_call.1']
    #allocation4 [shape = 's32[2]{0}', space=sflag, size = 0x8, scoped, tag = 'scoped memory for tpu_custom_call.1']
    #allocation5 [shape = 'u8[16384]{0}', space=vmem, size = 0x4000, scoped, tag = 'output window, operand 0']
    %15 = vsyncpa [#allocation4], 0
    %16 = vsyncpa [#allocation3], 0
    %s17 = scalar_lea.sflag [#allocation3], 1
    %18 = vsyncpa %s17, 0
    loop: start=0, step=1, limit=4
    $region2: #{tpu_custom_call.1} parent=1 // loop_pre_header
      _
    $region3: #{tpu_custom_call.1} parent=1 // loop_header
      %s20 = sphi 0, %s24
      %p21 = scmp.ge.s32.totalorder %s20, 4
      %s30 = sphi 0, %s32
      %s33 = sphi 0, %s30
      %s34 = sphi 0, %s33
      %s50 = sphi 0, %s34
      %s54 = sphi 0, %s54
      %s56 = sphi 0, %s54
      %s57 = sphi 0, %s56
      %s71 = sphi 0, %s57
      %s75 = sphi 0, %s75
      %s77 = sphi 0, %s75
      %s78 = sphi 0, %s77
      %s92 = sphi 0, %s78
      %s96 = sphi 0, %s96
      %s98 = sphi 0, %s96
      %s99 = sphi 0, %s98
      %s113 = sphi 0, %s99
      %s117 = sphi 0, %s117
      %s119 = sphi 0, %s117
      %s120 = sphi 0, %s119
      %s134 = sphi 0, %s120
      %s138 = sphi 0, %s138
      %s140 = sphi 0, %s138
      %s141 = sphi 0, %s140
      %s155 = sphi 0, %s141
      %s159 = sphi 0, %s159
      %s161 = sphi 0, %s159
      %s162 = sphi 0, %s161
      %s176 = sphi 0, %s162
      %s180 = sphi 0, %s180
      %s182 = sphi 0, %s180
      %s183 = sphi 0, %s182
      %s197 = sphi 0, %s183
      %s201 = sphi 0, %s201
      %s203 = sphi 0, %s201
      %s204 = sphi 0, %s203
      %s218 = sphi 0, %s204
      %s222 = sphi 0, %s222
      %s224 = sphi 0, %s222
      %s225 = sphi 0, %s224
      %s239 = sphi 0, %s225
      %s245 = sphi 0, %s247
      %s248 = sphi 0, %s245
      %s249 = sphi 0, %s248
      %s265 = sphi 0, %s249
    $region4: #{tpu_custom_call.1} parent=1 // loop_header_branch
      %23 = sbr.rel (%p21) target = $region8
    $region5: #{tpu_custom_call.1} parent=1 // loop_body
      %s25 = ssub.s32 %s20, 1
      %s26 = ssub.s32 %s20, 2
      %s27 = sadd.s32 %s20, 1
      %s28 = ssub.s32 %s20, %s27
      %p29 = scmp.eq.s32.totalorder %s28, 0
      %s31 = sadd.s32 %s30, 1
      %s32 = scalar_select %p29, %s30, %s31
      %p35 = pneg %p29
      %p36 = scmp.eq.s32.totalorder %s20, 1
      %p37 = por %p35, %p36
      %p38 = scmp.ne.s32.totalorder %s30, %s33
      %p39 = scmp.eq.s32.totalorder %s20, 0
      %p40 = por %p38, %p39
      %p41 = scmp.ne.s32.totalorder %s30, %s33
      %p42 = scmp.eq.s32.totalorder %s25, 1
      %p43 = por %p41, %p42
      %p44 = scmp.ne.s32.totalorder %s33, %s34
      %p45 = scmp.eq.s32.totalorder %s25, 0
      %p46 = por %p44, %p45
      %p47 = scmp.ne.s32.totalorder %s33, %s34
      %p48 = scmp.eq.s32.totalorder %s26, 1
      %p49 = por %p47, %p48
      %p51 = scmp.ne.s32.totalorder %s34, %s50
      %p52 = scmp.eq.s32.totalorder %s26, 0
      %p53 = por %p51, %p52
      %s55 = sadd.s32 %s54, 1
      %p58 = scmp.eq.s32.totalorder %s20, 1
      %p59 = scmp.ne.s32.totalorder %s54, %s56
      %p60 = scmp.eq.s32.totalorder %s20, 0
      %p61 = por %p59, %p60
      %p62 = scmp.ne.s32.totalorder %s54, %s56
      %p63 = scmp.eq.s32.totalorder %s25, 1
      %p64 = por %p62, %p63
      %p65 = scmp.ne.s32.totalorder %s56, %s57
      %p66 = scmp.eq.s32.totalorder %s25, 0
      %p67 = por %p65, %p66
      %p68 = scmp.ne.s32.totalorder %s56, %s57
      %p69 = scmp.eq.s32.totalorder %s26, 1
      %p70 = por %p68, %p69
      %p72 = scmp.ne.s32.totalorder %s57, %s71
      %p73 = scmp.eq.s32.totalorder %s26, 0
      %p74 = por %p72, %p73
      %s76 = sadd.s32 %s75, 1
      %p79 = scmp.eq.s32.totalorder %s20, 1
      %p80 = scmp.ne.s32.totalorder %s75, %s77
      %p81 = scmp.eq.s32.totalorder %s20, 0
      %p82 = por %p80, %p81
      %p83 = scmp.ne.s32.totalorder %s75, %s77
      %p84 = scmp.eq.s32.totalorder %s25, 1
      %p85 = por %p83, %p84
      %p86 = scmp.ne.s32.totalorder %s77, %s78
      %p87 = scmp.eq.s32.totalorder %s25, 0
      %p88 = por %p86, %p87
      %p89 = scmp.ne.s32.totalorder %s77, %s78
      %p90 = scmp.eq.s32.totalorder %s26, 1
      %p91 = por %p89, %p90
      %p93 = scmp.ne.s32.totalorder %s78, %s92
      %p94 = scmp.eq.s32.totalorder %s26, 0
      %p95 = por %p93, %p94
      %s97 = sadd.s32 %s96, 1
      %p100 = scmp.eq.s32.totalorder %s20, 1
      %p101 = scmp.ne.s32.totalorder %s96, %s98
      %p102 = scmp.eq.s32.totalorder %s20, 0
      %p103 = por %p101, %p102
      %p104 = scmp.ne.s32.totalorder %s96, %s98
      %p105 = scmp.eq.s32.totalorder %s25, 1
      %p106 = por %p104, %p105
      %p107 = scmp.ne.s32.totalorder %s98, %s99
      %p108 = scmp.eq.s32.totalorder %s25, 0
      %p109 = por %p107, %p108
      %p110 = scmp.ne.s32.totalorder %s98, %s99
      %p111 = scmp.eq.s32.totalorder %s26, 1
      %p112 = por %p110, %p111
      %p114 = scmp.ne.s32.totalorder %s99, %s113
      %p115 = scmp.eq.s32.totalorder %s26, 0
      %p116 = por %p114, %p115
      %s118 = sadd.s32 %s117, 1
      %p121 = scmp.eq.s32.totalorder %s20, 1
      %p122 = scmp.ne.s32.totalorder %s117, %s119
      %p123 = scmp.eq.s32.totalorder %s20, 0
      %p124 = por %p122, %p123
      %p125 = scmp.ne.s32.totalorder %s117, %s119
      %p126 = scmp.eq.s32.totalorder %s25, 1
      %p127 = por %p125, %p126
      %p128 = scmp.ne.s32.totalorder %s119, %s120
      %p129 = scmp.eq.s32.totalorder %s25, 0
      %p130 = por %p128, %p129
      %p131 = scmp.ne.s32.totalorder %s119, %s120
      %p132 = scmp.eq.s32.totalorder %s26, 1
      %p133 = por %p131, %p132
      %p135 = scmp.ne.s32.totalorder %s120, %s134
      %p136 = scmp.eq.s32.totalorder %s26, 0
      %p137 = por %p135, %p136
      %s139 = sadd.s32 %s138, 1
      %p142 = scmp.eq.s32.totalorder %s20, 1
      %p143 = scmp.ne.s32.totalorder %s138, %s140
      %p144 = scmp.eq.s32.totalorder %s20, 0
      %p145 = por %p143, %p144
      %p146 = scmp.ne.s32.totalorder %s138, %s140
      %p147 = scmp.eq.s32.totalorder %s25, 1
      %p148 = por %p146, %p147
      %p149 = scmp.ne.s32.totalorder %s140, %s141
      %p150 = scmp.eq.s32.totalorder %s25, 0
      %p151 = por %p149, %p150
      %p152 = scmp.ne.s32.totalorder %s140, %s141
      %p153 = scmp.eq.s32.totalorder %s26, 1
      %p154 = por %p152, %p153
      %p156 = scmp.ne.s32.totalorder %s141, %s155
      %p157 = scmp.eq.s32.totalorder %s26, 0
      %p158 = por %p156, %p157
      %s160 = sadd.s32 %s159, 1
      %p163 = scmp.eq.s32.totalorder %s20, 1
      %p164 = scmp.ne.s32.totalorder %s159, %s161
      %p165 = scmp.eq.s32.totalorder %s20, 0
      %p166 = por %p164, %p165
      %p167 = scmp.ne.s32.totalorder %s159, %s161
      %p168 = scmp.eq.s32.totalorder %s25, 1
      %p169 = por %p167, %p168
      %p170 = scmp.ne.s32.totalorder %s161, %s162
      %p171 = scmp.eq.s32.totalorder %s25, 0
      %p172 = por %p170, %p171
      %p173 = scmp.ne.s32.totalorder %s161, %s162
      %p174 = scmp.eq.s32.totalorder %s26, 1
      %p175 = por %p173, %p174
      %p177 = scmp.ne.s32.totalorder %s162, %s176
      %p178 = scmp.eq.s32.totalorder %s26, 0
      %p179 = por %p177, %p178
      %s181 = sadd.s32 %s180, 1
      %p184 = scmp.eq.s32.totalorder %s20, 1
      %p185 = scmp.ne.s32.totalorder %s180, %s182
      %p186 = scmp.eq.s32.totalorder %s20, 0
      %p187 = por %p185, %p186
      %p188 = scmp.ne.s32.totalorder %s180, %s182
      %p189 = scmp.eq.s32.totalorder %s25, 1
      %p190 = por %p188, %p189
      %p191 = scmp.ne.s32.totalorder %s182, %s183
      %p192 = scmp.eq.s32.totalorder %s25, 0
      %p193 = por %p191, %p192
      %p194 = scmp.ne.s32.totalorder %s182, %s183
      %p195 = scmp.eq.s32.totalorder %s26, 1
      %p196 = por %p194, %p195
      %p198 = scmp.ne.s32.totalorder %s183, %s197
      %p199 = scmp.eq.s32.totalorder %s26, 0
      %p200 = por %p198, %p199
      %s202 = sadd.s32 %s201, 1
      %p205 = scmp.eq.s32.totalorder %s20, 1
      %p206 = scmp.ne.s32.totalorder %s201, %s203
      %p207 = scmp.eq.s32.totalorder %s20, 0
      %p208 = por %p206, %p207
      %p209 = scmp.ne.s32.totalorder %s201, %s203
      %p210 = scmp.eq.s32.totalorder %s25, 1
      %p211 = por %p209, %p210
      %p212 = scmp.ne.s32.totalorder %s203, %s204
      %p213 = scmp.eq.s32.totalorder %s25, 0
      %p214 = por %p212, %p213
      %p215 = scmp.ne.s32.totalorder %s203, %s204
      %p216 = scmp.eq.s32.totalorder %s26, 1
      %p217 = por %p215, %p216
      %p219 = scmp.ne.s32.totalorder %s204, %s218
      %p220 = scmp.eq.s32.totalorder %s26, 0
      %p221 = por %p219, %p220
      %s223 = sadd.s32 %s222, 1
      %p226 = scmp.eq.s32.totalorder %s20, 1
      %p227 = scmp.ne.s32.totalorder %s222, %s224
      %p228 = scmp.eq.s32.totalorder %s20, 0
      %p229 = por %p227, %p228
      %p230 = scmp.ne.s32.totalorder %s222, %s224
      %p231 = scmp.eq.s32.totalorder %s25, 1
      %p232 = por %p230, %p231
      %p233 = scmp.ne.s32.totalorder %s224, %s225
      %p234 = scmp.eq.s32.totalorder %s25, 0
      %p235 = por %p233, %p234
      %p236 = scmp.ne.s32.totalorder %s224, %s225
      %p237 = scmp.eq.s32.totalorder %s26, 1
      %p238 = por %p236, %p237
      %p240 = scmp.ne.s32.totalorder %s225, %s239
      %p241 = scmp.eq.s32.totalorder %s26, 0
      %p242 = por %p240, %p241
      %s243 = ssub.s32 %s20, %s27
      %p244 = scmp.eq.s32.totalorder %s243, 0
      %s246 = sadd.s32 %s245, 1
      %s247 = scalar_select %p244, %s245, %s246
      %p250 = pneg %p244
      %p251 = scmp.eq.s32.totalorder %s20, 1
      %p252 = por %p250, %p251
      %p253 = scmp.ne.s32.totalorder %s245, %s248
      %p254 = scmp.eq.s32.totalorder %s20, 0
      %p255 = por %p253, %p254
      %p256 = scmp.ne.s32.totalorder %s245, %s248
      %p257 = scmp.eq.s32.totalorder %s25, 1
      %p258 = por %p256, %p257
      %p259 = scmp.ne.s32.totalorder %s248, %s249
      %p260 = scmp.eq.s32.totalorder %s25, 0
      %p261 = por %p259, %p260
      %p262 = scmp.ne.s32.totalorder %s248, %s249
      %p263 = scmp.eq.s32.totalorder %s26, 1
      %p264 = por %p262, %p263
      %p266 = scmp.ne.s32.totalorder %s249, %s265
      %p267 = scmp.eq.s32.totalorder %s26, 0
      %p268 = por %p266, %p267
      %p269 = scmp.le.s32.totalorder 1, %s20
      %p270 = scmp.lt.s32.totalorder %s20, 3
      %p271 = pnand %p269, %p270
      %p272 = pneg %p271
      // Predicated region
      $region9: #{tpu_custom_call.1} parent=5 // pred_check
        _
      $region10: #{tpu_custom_call.1} parent=5 // pred_check_branch
        %274 = sbr.rel (%p271) target = $region12
      $region11: #{tpu_custom_call.1} parent=5 // pred_region
        %s275 = ssub.s32 %s20, 1
        // Predicated region
        $region13: #{tpu_custom_call.1} parent=11 // pred_check
          %p276 = pneg %p67
        $region14: #{tpu_custom_call.1} parent=11 // pred_check_branch
          %278 = sbr.rel (%p276) target = $region16
        $region15: #{tpu_custom_call.1} parent=11 // pred_region
          _
        $region16: #{tpu_custom_call.1} parent=11 // pred_fallthru
          _
        // Predicated region
        $region17: #{tpu_custom_call.1} parent=11 // pred_check
          %p279 = pneg %p88
        $region18: #{tpu_custom_call.1} parent=11 // pred_check_branch
          %281 = sbr.rel (%p279) target = $region20
        $region19: #{tpu_custom_call.1} parent=11 // pred_region
          _
        $region20: #{tpu_custom_call.1} parent=11 // pred_fallthru
          _
        // Predicated region
        $region21: #{tpu_custom_call.1} parent=11 // pred_check
          %p282 = pneg %p109
        $region22: #{tpu_custom_call.1} parent=11 // pred_check_branch
          %284 = sbr.rel (%p282) target = $region24
        $region23: #{tpu_custom_call.1} parent=11 // pred_region
          _
        $region24: #{tpu_custom_call.1} parent=11 // pred_fallthru
          _
        // Predicated region
        $region25: #{tpu_custom_call.1} parent=11 // pred_check
          %p285 = pneg %p130
        $region26: #{tpu_custom_call.1} parent=11 // pred_check_branch
          %287 = sbr.rel (%p285) target = $region28
        $region27: #{tpu_custom_call.1} parent=11 // pred_region
          _
        $region28: #{tpu_custom_call.1} parent=11 // pred_fallthru
          _
        // Predicated region
        $region29: #{tpu_custom_call.1} parent=11 // pred_check
          %p288 = pneg %p151
        $region30: #{tpu_custom_call.1} parent=11 // pred_check_branch
          %290 = sbr.rel (%p288) target = $region32
        $region31: #{tpu_custom_call.1} parent=11 // pred_region
          _
        $region32: #{tpu_custom_call.1} parent=11 // pred_fallthru
          _
        // Predicated region
        $region33: #{tpu_custom_call.1} parent=11 // pred_check
          %p291 = pneg %p172
        $region34: #{tpu_custom_call.1} parent=11 // pred_check_branch
          %293 = sbr.rel (%p291) target = $region36
        $region35: #{tpu_custom_call.1} parent=11 // pred_region
          _
        $region36: #{tpu_custom_call.1} parent=11 // pred_fallthru
          _
        // Predicated region
        $region37: #{tpu_custom_call.1} parent=11 // pred_check
          %p294 = pneg %p193
        $region38: #{tpu_custom_call.1} parent=11 // pred_check_branch
          %296 = sbr.rel (%p294) target = $region40
        $region39: #{tpu_custom_call.1} parent=11 // pred_region
          _
        $region40: #{tpu_custom_call.1} parent=11 // pred_fallthru
          _
        // Predicated region
        $region41: #{tpu_custom_call.1} parent=11 // pred_check
          %p297 = pneg %p214
        $region42: #{tpu_custom_call.1} parent=11 // pred_check_branch
          %299 = sbr.rel (%p297) target = $region44
        $region43: #{tpu_custom_call.1} parent=11 // pred_region
          _
        $region44: #{tpu_custom_call.1} parent=11 // pred_fallthru
          _
        // Predicated region
        $region45: #{tpu_custom_call.1} parent=11 // pred_check
          %p300 = pneg %p235
        $region46: #{tpu_custom_call.1} parent=11 // pred_check_branch
          %302 = sbr.rel (%p300) target = $region48
        $region47: #{tpu_custom_call.1} parent=11 // pred_region
          %s304 = ssub.s32 16, 16
          %305 = vsyncadd [#allocation4], %s304
          %s307 = sshll.u32 %s9, 4
          %s308 = int_to_ptr.vmem [resolvable:$true] %s307
          %310 = dma.vmem_to_smem %s308, 16, [#allocation2], [#allocation4]
        $region48: #{tpu_custom_call.1} parent=11 // pred_fallthru
          _
      $region12: #{tpu_custom_call.1} parent=5 // pred_fallthru
        _
      %p311 = scmp.lt.s32.totalorder %s20, 2
      // Predicated region
      $region49: #{tpu_custom_call.1} parent=5 // pred_check
        %p312 = pneg %p311
      $region50: #{tpu_custom_call.1} parent=5 // pred_check_branch
        %314 = sbr.rel (%p312) target = $region52
      $region51: #{tpu_custom_call.1} parent=5 // pred_region
        // Predicated region
        $region53: #{tpu_custom_call.1} parent=51 // pred_check
          %p315 = pneg %p40
        $region54: #{tpu_custom_call.1} parent=51 // pred_check_branch
          %317 = sbr.rel (%p315) target = $region56
        $region55: #{tpu_custom_call.1} parent=51 // pred_region
          %s318 = smul.u32 2, %s20
          %s319 = ssub.s32 3, %s318
          %p320 = scmp.lt.s32.totalorder %s319, 2
          %s321 = scalar_select %p320, %s319, 2
          %s322 = smul.u32 128, %s321
          %p323 = scmp.lt.s32.totalorder %s318, 2
          %s324 = scalar_select %p323, %s318, 2
          %s325 = smul.addr %s324, 8
          %s326 = scalar_lea.vmem %s0, %s325
          %s327 = smul.u32 2, %s20
          %s328 = ssub.s32 3, %s327
          %p329 = scmp.lt.s32.totalorder %s328, 2
          %s330 = scalar_select %p329, %s328, 2
          %s331 = smul.u32 128, %s330
        $region56: #{tpu_custom_call.1} parent=51 // pred_fallthru
          _
      $region52: #{tpu_custom_call.1} parent=5 // pred_fallthru
        _
      %p332 = scmp.le.s32.totalorder 1, %s20
      %p333 = scmp.lt.s32.totalorder %s20, 3
      %p334 = pnand %p332, %p333
      %p335 = pneg %p334
      // Predicated region
      $region57: #{tpu_custom_call.1} parent=5 // pred_check
        _
      $region58: #{tpu_custom_call.1} parent=5 // pred_check_branch
        %337 = sbr.rel (%p334) target = $region60
      $region59: #{tpu_custom_call.1} parent=5 // pred_region
        %s338 = ssub.s32 %s20, 1
        // Predicated region
        $region61: #{tpu_custom_call.1} parent=59 // pred_check
          %p339 = pneg %p235
        $region62: #{tpu_custom_call.1} parent=59 // pred_check_branch
          %341 = sbr.rel (%p339) target = $region64
        $region63: #{tpu_custom_call.1} parent=59 // pred_region
          %342 = dma.done [#allocation4], 16
        $region64: #{tpu_custom_call.1} parent=59 // pred_fallthru
          _
        %343 = sfence
        %s344 = smul.u32 2, %s25
        %s345 = ssub.s32 3, %s344
        %p346 = scmp.lt.s32.totalorder %s345, 2
        %s347 = scalar_select %p346, %s345, 2
        %s348 = smul.u32 128, %s347
        %p349 = scmp.lt.s32.totalorder %s344, 2
        %s350 = scalar_select %p349, %s344, 2
        %s351 = smul.addr %s350, 8
        %s352 = scalar_lea.vmem %s0, %s351
        %p353 = pneg %p46
        %p354 = pneg %p43
        %p355 = pneg %p67
        %p356 = pneg %p64
        %p357 = pneg %p88
        %p358 = pneg %p85
        %p359 = pneg %p109
        %p360 = pneg %p106
        %p361 = pneg %p130
        %p362 = pneg %p127
        %p363 = pneg %p151
        %p364 = pneg %p148
        %p365 = pneg %p172
        %p366 = pneg %p169
        %p367 = pneg %p193
        %p368 = pneg %p190
        %p369 = pneg %p214
        %p370 = pneg %p211
        %p371 = pneg %p235
        %p372 = pneg %p232
        %p373 = pneg %p261
        %p374 = pneg %p258
        %s375 = sand.u32 %s248, 1
        %s376 = scalar_lea.sflag [#allocation3], %s375
        %s377 = sand.u32 %s248, 1
        %s378 = smul.addr %s377, 16
        %s379 = scalar_lea.vmem [#allocation5], %s378
        %s380 = smul.u32 2, %s25
        %s381 = ssub.s32 3, %s380
        %p382 = scmp.lt.s32.totalorder %s381, 2
        %s383 = scalar_select %p382, %s381, 2
        %s384 = smul.u32 128, %s383
        %p385 = scmp.lt.s32.totalorder %s380, 2
        %s386 = scalar_select %p385, %s380, 2
        %s387 = smul.addr %s386, 8
        %s388 = scalar_lea.vmem %s0, %s387
        %s389 = smul.u32 2, %s25
        %s390 = ssub.s32 3, %s389
        %p391 = scmp.lt.s32.totalorder %s390, 2
        %s392 = scalar_select %p391, %s390, 2
        %s393 = smul.u32 128, %s392
        %s394 = smul.u32 2, %s25
        %s395 = ssub.s32 3, %s394
        %p396 = scmp.lt.s32.totalorder %s395, 2
        %s397 = scalar_select %p396, %s395, 2
        %s398 = smul.u32 128, %s397
        %v400 = vld [vmem:[%s388] sm:$0xff]
        %v401 = vld [vmem:[%s388 + $0x8] sm:$0xff]
        %v402 = vpack.c.bf16 %v401, %v400
        %v403 = vld [vmem:[%s1] sm:$0xf]
        %v404 = vld [vmem:[%s1 + $0x4] sm:$0xf]
        %v405 = vld [vmem:[%s1 + $0x8] sm:$0xf]
        %v406 = vld [vmem:[%s1 + $0xc] sm:$0xf]
        %v407 = vld [vmem:[%s1 + $0x10] sm:$0xf]
        %v408 = vld [vmem:[%s1 + $0x14] sm:$0xf]
        %v409 = vld [vmem:[%s1 + $0x18] sm:$0xf]
        %v410 = vld [vmem:[%s1 + $0x1c] sm:$0xf]
        %v411 = vld [vmem:[%s1 + $0x20] sm:$0xf]
        %v412 = vld [vmem:[%s1 + $0x24] sm:$0xf]
        %v413 = vld [vmem:[%s1 + $0x28] sm:$0xf]
        %v414 = vld [vmem:[%s1 + $0x2c] sm:$0xf]
        %v415 = vld [vmem:[%s1 + $0x30] sm:$0xf]
        %v416 = vld [vmem:[%s1 + $0x34] sm:$0xf]
        %v417 = vld [vmem:[%s1 + $0x38] sm:$0xf]
        %v418 = vld [vmem:[%s1 + $0x3c] sm:$0xf]
        %v419 = vld [vmem:[%s2] sm:$0x1]
        %v421 = vlaneseq
        %v422 = vshrl.u32 %v421, 7
        %v423 = vsub.s32 0, %v422
        %v424 = vrot.slane %v419, %v423
        %v442 = vunpack.c.l.b16 %v403
        %v443 = vunpack.c.l.b16 %v404
        %v444 = vunpack.c.l.b16 %v405
        %v445 = vunpack.c.l.b16 %v406
        %v446 = vunpack.c.l.b16 %v407
        %v447 = vunpack.c.l.b16 %v408
        %v448 = vunpack.c.l.b16 %v409
        %v449 = vunpack.c.l.b16 %v410
        %v450 = vunpack.c.l.b16 %v411
        %v451 = vunpack.c.l.b16 %v412
        %v452 = vunpack.c.l.b16 %v413
        %v453 = vunpack.c.l.b16 %v414
        %v454 = vunpack.c.l.b16 %v415
        %v455 = vunpack.c.l.b16 %v416
        %v456 = vunpack.c.l.b16 %v417
        %v457 = vunpack.c.l.b16 %v418
        %v458 = vpack.c.b16 %v443, %v442
        %v459 = vpack.c.b16 %v445, %v444
        %v460 = vpack.c.b16 %v447, %v446
        %v461 = vpack.c.b16 %v449, %v448
        %v462 = vpack.c.b16 %v451, %v450
        %v463 = vpack.c.b16 %v453, %v452
        %v464 = vpack.c.b16 %v455, %v454
        %v465 = vpack.c.b16 %v457, %v456
        %474 = vmatprep.subr.bf16.mxu0 0
        %475 = vmatpush1.bf16.msra.mxu0 %v465
        %476 = vmatprep.subr.bf16.mxu0 0
        %477 = vmatpush1.bf16.msra.mxu0 %v464
        %478 = vmatprep.subr.bf16.mxu0 0
        %479 = vmatpush1.bf16.msra.mxu0 %v463
        %480 = vmatprep.subr.bf16.mxu0 0
        %481 = vmatpush1.bf16.msra.mxu0 %v462
        %482 = vmatprep.subr.bf16.mxu0 0
        %483 = vmatpush1.bf16.msra.mxu0 %v461
        %484 = vmatprep.subr.bf16.mxu0 0
        %485 = vmatpush1.bf16.msra.mxu0 %v460
        %486 = vmatprep.subr.bf16.mxu0 0
        %487 = vmatpush1.bf16.msra.mxu0 %v459
        %488 = vmatprep.subr.bf16.mxu0 0
        %489 = vmatpush1.bf16.msra.mxu0 %v458
        %490 = vmatprep.subr.bf16.mxu0 0
        %491 = vmatpush2.bf16.msra.mxu0 0
        %492 = vmatprep.subr.bf16.mxu0 0
        %493 = vmatpush2.bf16.msra.mxu0 0
        %494 = vmatprep.subr.bf16.mxu0 0
        %495 = vmatpush2.bf16.msra.mxu0 0
        %496 = vmatprep.subr.bf16.mxu0 0
        %497 = vmatpush2.bf16.msra.mxu0 0
        %498 = vmatprep.subr.bf16.mxu0 0
        %499 = vmatpush2.bf16.msra.mxu0 0
        %500 = vmatprep.subr.bf16.mxu0 0
        %501 = vmatpush2.bf16.msra.mxu0 0
        %502 = vmatprep.subr.bf16.mxu0 0
        %503 = vmatpush2.bf16.msra.mxu0 0
        %504 = vmatprep.subr.bf16.mxu0 0
        %505 = vmatpush2.bf16.msra.mxu0 0
        %506 = vmatprep.mubr.bf16.mxu0 0
        %507 = vmatmul.mubr.bf16.gmra.mxu0 %v402
        %v508 = vpop.f32.mrf.mxu0
        %v509 = vadd.f32 %v424, %v508
        %v510 = vpop.f32.mrf.mxu0
        %v511 = vpop.f32.mrf.mxu0
        %v512 = vadd.f32 %v424, %v511
        %v513 = vpop.f32.mrf.mxu0
        %514 = vdwg.mxu0
        %v515 = vmax.f32 %v509, 0.0
        %v516 = vmax.f32 %v512, 0.0
        %v517 = vld [vmem:[%s3] sm:$0xff]
        %vm518 = vcmask 64512
        %v520 = vsel %vm518, %v515, 0
        %v523 = vsel %vm518, %v516, 0
        %525 = vmatprep.subr.mxu0 0.0
        %526 = vmatpush1.msra.mxu0 0.0
        %527 = vmatprep.subr.mxu0 0.0
        %528 = vmatpush1.msra.mxu0 0.0
        %529 = vmatprep.subr.mxu0 0.0
        %530 = vmatpush1.msra.mxu0 0.0
        %531 = vmatprep.subr.mxu0 0.0
        %532 = vmatpush1.msra.mxu0 0.0
        %533 = vmatprep.subr.mxu0 0.0
        %534 = vmatpush1.msra.mxu0 0.0
        %535 = vmatprep.subr.mxu0 0.0
        %536 = vmatpush1.msra.mxu0 0.0
        %537 = vmatprep.subr.mxu0 0.0
        %538 = vmatpush1.msra.mxu0 0.0
        %539 = vmatprep.subr.mxu0 0.0
        %540 = vmatpush1.msra.mxu0 0.0
        %541 = vmatprep.subr.mxu0 0.0
        %542 = vmatpush1.msra.mxu0 0.0
        %543 = vmatprep.subr.mxu0 0.0
        %544 = vmatpush1.msra.mxu0 0.0
        %545 = vmatprep.subr.mxu0 0.0
        %546 = vmatpush1.msra.mxu0 0.0
        %547 = vmatprep.subr.mxu0 0.0
        %548 = vmatpush1.msra.mxu0 0.0
        %549 = vmatprep.subr.mxu0 0.0
        %550 = vmatpush1.msra.mxu0 0.0
        %551 = vmatprep.subr.mxu0 0.0
        %552 = vmatpush1.msra.mxu0 0.0
        %553 = vmatprep.subr.mxu0 0.0
        %554 = vmatpush1.msra.mxu0 0.0
        %555 = vmatprep.subr.mxu0 0.0
        %556 = vmatpush1.msra.mxu0 %v517
        %557 = vmatprep.subr.mxu0 0.0
        %558 = vmatpush2.msra.mxu0 0.0
        %559 = vmatprep.subr.mxu0 0.0
        %560 = vmatpush2.msra.mxu0 0.0
        %561 = vmatprep.subr.mxu0 0.0
        %562 = vmatpush2.msra.mxu0 0.0
        %563 = vmatprep.subr.mxu0 0.0
        %564 = vmatpush2.msra.mxu0 0.0
        %565 = vmatprep.subr.mxu0 0.0
        %566 = vmatpush2.msra.mxu0 0.0
        %567 = vmatprep.subr.mxu0 0.0
        %568 = vmatpush2.msra.mxu0 0.0
        %569 = vmatprep.subr.mxu0 0.0
        %570 = vmatpush2.msra.mxu0 0.0
        %571 = vmatprep.subr.mxu0 0.0
        %572 = vmatpush2.msra.mxu0 0.0
        %573 = vmatprep.subr.mxu0 0.0
        %574 = vmatpush2.msra.mxu0 0.0
        %575 = vmatprep.subr.mxu0 0.0
        %576 = vmatpush2.msra.mxu0 0.0
        %577 = vmatprep.subr.mxu0 0.0
        %578 = vmatpush2.msra.mxu0 0.0
        %579 = vmatprep.subr.mxu0 0.0
        %580 = vmatpush2.msra.mxu0 0.0
        %581 = vmatprep.subr.mxu0 0.0
        %582 = vmatpush2.msra.mxu0 0.0
        %583 = vmatprep.subr.mxu0 0.0
        %584 = vmatpush2.msra.mxu0 0.0
        %585 = vmatprep.subr.mxu0 0.0
        %586 = vmatpush2.msra.mxu0 0.0
        %587 = vmatprep.subr.mxu0 0.0
        %588 = vmatpush2.msra.mxu0 0.0
        %589 = vmatprep.mubr.f32.mxu0 0.0
        %590 = vmatmul.mubr.f32.gmra.mxu0 %v520
        %v591 = vpop.f32.mrf.mxu0
        %v592 = vadd.f32 0.0, %v591
        %v593 = vpop.f32.mrf.mxu0
        %594 = vmatprep.mubr.f32.mxu0 0.0
        %595 = vmatmul.mubr.f32.gmra.mxu0 %v523
        %v596 = vpop.f32.mrf.mxu0
        %v597 = vadd.f32 0.0, %v596
        %v598 = vpop.f32.mrf.mxu0
        %599 = vdwg.mxu0
        %v600 = vmax.f32 %v592, 0.0
        %v601 = vmax.f32 %v597, 0.0
        %v602 = vld [vmem:[%s4] sm:$0xff]
        %v604 = vsel %vm518, %v600, 0
        %v607 = vsel %vm518, %v601, 0
        %609 = vmatprep.subr.mxu0 0.0
        %610 = vmatpush1.msra.mxu0 0.0
        %611 = vmatprep.subr.mxu0 0.0
        %612 = vmatpush1.msra.mxu0 0.0
        %613 = vmatprep.subr.mxu0 0.0
        %614 = vmatpush1.msra.mxu0 0.0
        %615 = vmatprep.subr.mxu0 0.0
        %616 = vmatpush1.msra.mxu0 0.0
        %617 = vmatprep.subr.mxu0 0.0
        %618 = vmatpush1.msra.mxu0 0.0
        %619 = vmatprep.subr.mxu0 0.0
        %620 = vmatpush1.msra.mxu0 0.0
        %621 = vmatprep.subr.mxu0 0.0
        %622 = vmatpush1.msra.mxu0 0.0
        %623 = vmatprep.subr.mxu0 0.0
        %624 = vmatpush1.msra.mxu0 0.0
        %625 = vmatprep.subr.mxu0 0.0
        %626 = vmatpush1.msra.mxu0 0.0
        %627 = vmatprep.subr.mxu0 0.0
        %628 = vmatpush1.msra.mxu0 0.0
        %629 = vmatprep.subr.mxu0 0.0
        %630 = vmatpush1.msra.mxu0 0.0
        %631 = vmatprep.subr.mxu0 0.0
        %632 = vmatpush1.msra.mxu0 0.0
        %633 = vmatprep.subr.mxu0 0.0
        %634 = vmatpush1.msra.mxu0 0.0
        %635 = vmatprep.subr.mxu0 0.0
        %636 = vmatpush1.msra.mxu0 0.0
        %637 = vmatprep.subr.mxu0 0.0
        %638 = vmatpush1.msra.mxu0 0.0
        %639 = vmatprep.subr.mxu0 0.0
        %640 = vmatpush1.msra.mxu0 %v602
        %641 = vmatprep.subr.mxu0 0.0
        %642 = vmatpush2.msra.mxu0 0.0
        %643 = vmatprep.subr.mxu0 0.0
        %644 = vmatpush2.msra.mxu0 0.0
        %645 = vmatprep.subr.mxu0 0.0
        %646 = vmatpush2.msra.mxu0 0.0
        %647 = vmatprep.subr.mxu0 0.0
        %648 = vmatpush2.msra.mxu0 0.0
        %649 = vmatprep.subr.mxu0 0.0
        %650 = vmatpush2.msra.mxu0 0.0
        %651 = vmatprep.subr.mxu0 0.0
        %652 = vmatpush2.msra.mxu0 0.0
        %653 = vmatprep.subr.mxu0 0.0
        %654 = vmatpush2.msra.mxu0 0.0
        %655 = vmatprep.subr.mxu0 0.0
        %656 = vmatpush2.msra.mxu0 0.0
        %657 = vmatprep.subr.mxu0 0.0
        %658 = vmatpush2.msra.mxu0 0.0
        %659 = vmatprep.subr.mxu0 0.0
        %660 = vmatpush2.msra.mxu0 0.0
        %661 = vmatprep.subr.mxu0 0.0
        %662 = vmatpush2.msra.mxu0 0.0
        %663 = vmatprep.subr.mxu0 0.0
        %664 = vmatpush2.msra.mxu0 0.0
        %665 = vmatprep.subr.mxu0 0.0
        %666 = vmatpush2.msra.mxu0 0.0
        %667 = vmatprep.subr.mxu0 0.0
        %668 = vmatpush2.msra.mxu0 0.0
        %669 = vmatprep.subr.mxu0 0.0
        %670 = vmatpush2.msra.mxu0 0.0
        %671 = vmatprep.subr.mxu0 0.0
        %672 = vmatpush2.msra.mxu0 0.0
        %673 = vmatprep.mubr.f32.mxu0 0.0
        %674 = vmatmul.mubr.f32.gmra.mxu0 %v604
        %v675 = vpop.f32.mrf.mxu0
        %v676 = vadd.f32 0.0, %v675
        %v677 = vpop.f32.mrf.mxu0
        %678 = vmatprep.mubr.f32.mxu0 0.0
        %679 = vmatmul.mubr.f32.gmra.mxu0 %v607
        %v680 = vpop.f32.mrf.mxu0
        %v681 = vadd.f32 0.0, %v680
        %v682 = vpop.f32.mrf.mxu0
        %683 = vdwg.mxu0
        %v684 = vxor.u32 %v676, 2147483648
        %v685 = vxor.u32 %v681, 2147483648
        %v686 = vmul.f32 %v684, 1.442695
        %v687 = vpow.pop %v686
        %v688 = vmul.f32 %v685, 1.442695
        %v689 = vpow.pop %v688
        %v690 = vadd.f32 %v687, 1.0
        %v691 = vadd.f32 %v689, 1.0
        %v692 = vrcp.pop %v690
        %v693 = vmul.f32 1.0, %v692
        %v694 = vrcp.pop %v691
        %v695 = vmul.f32 1.0, %v694
        %v696 = vmul.f32 %v515, %v693
        %v697 = vmul.f32 %v516, %v695
        %v698 = vld [vmem:[%s5] sm:$0xff]
        %v699 = vld [vmem:[%s6] sm:$0x1]
        %v701 = vlaneseq
        %v702 = vshrl.u32 %v701, 7
        %v703 = vsub.s32 0, %v702
        %v704 = vrot.slane %v699, %v703
        %v707 = vsel %vm518, %v696, 0
        %v710 = vsel %vm518, %v697, 0
        %712 = vmatprep.subr.mxu0 0.0
        %713 = vmatpush1.msra.mxu0 0.0
        %714 = vmatprep.subr.mxu0 0.0
        %715 = vmatpush1.msra.mxu0 0.0
        %716 = vmatprep.subr.mxu0 0.0
        %717 = vmatpush1.msra.mxu0 0.0
        %718 = vmatprep.subr.mxu0 0.0
        %719 = vmatpush1.msra.mxu0 0.0
        %720 = vmatprep.subr.mxu0 0.0
        %721 = vmatpush1.msra.mxu0 0.0
        %722 = vmatprep.subr.mxu0 0.0
        %723 = vmatpush1.msra.mxu0 0.0
        %724 = vmatprep.subr.mxu0 0.0
        %725 = vmatpush1.msra.mxu0 0.0
        %726 = vmatprep.subr.mxu0 0.0
        %727 = vmatpush1.msra.mxu0 0.0
        %728 = vmatprep.subr.mxu0 0.0
        %729 = vmatpush1.msra.mxu0 0.0
        %730 = vmatprep.subr.mxu0 0.0
        %731 = vmatpush1.msra.mxu0 0.0
        %732 = vmatprep.subr.mxu0 0.0
        %733 = vmatpush1.msra.mxu0 0.0
        %734 = vmatprep.subr.mxu0 0.0
        %735 = vmatpush1.msra.mxu0 0.0
        %736 = vmatprep.subr.mxu0 0.0
        %737 = vmatpush1.msra.mxu0 0.0
        %738 = vmatprep.subr.mxu0 0.0
        %739 = vmatpush1.msra.mxu0 0.0
        %740 = vmatprep.subr.mxu0 0.0
        %741 = vmatpush1.msra.mxu0 0.0
        %742 = vmatprep.subr.mxu0 0.0
        %743 = vmatpush1.msra.mxu0 %v698
        %744 = vmatprep.subr.mxu0 0.0
        %745 = vmatpush2.msra.mxu0 0.0
        %746 = vmatprep.subr.mxu0 0.0
        %747 = vmatpush2.msra.mxu0 0.0
        %748 = vmatprep.subr.mxu0 0.0
        %749 = vmatpush2.msra.mxu0 0.0
        %750 = vmatprep.subr.mxu0 0.0
        %751 = vmatpush2.msra.mxu0 0.0
        %752 = vmatprep.subr.mxu0 0.0
        %753 = vmatpush2.msra.mxu0 0.0
        %754 = vmatprep.subr.mxu0 0.0
        %755 = vmatpush2.msra.mxu0 0.0
        %756 = vmatprep.subr.mxu0 0.0
        %757 = vmatpush2.msra.mxu0 0.0
        %758 = vmatprep.subr.mxu0 0.0
        %759 = vmatpush2.msra.mxu0 0.0
        %760 = vmatprep.subr.mxu0 0.0
        %761 = vmatpush2.msra.mxu0 0.0
        %762 = vmatprep.subr.mxu0 0.0
        %763 = vmatpush2.msra.mxu0 0.0
        %764 = vmatprep.subr.mxu0 0.0
        %765 = vmatpush2.msra.mxu0 0.0
        %766 = vmatprep.subr.mxu0 0.0
        %767 = vmatpush2.msra.mxu0 0.0
        %768 = vmatprep.subr.mxu0 0.0
        %769 = vmatpush2.msra.mxu0 0.0
        %770 = vmatprep.subr.mxu0 0.0
        %771 = vmatpush2.msra.mxu0 0.0
        %772 = vmatprep.subr.mxu0 0.0
        %773 = vmatpush2.msra.mxu0 0.0
        %774 = vmatprep.subr.mxu0 0.0
        %775 = vmatpush2.msra.mxu0 0.0
        %776 = vmatprep.mubr.f32.mxu0 0.0
        %777 = vmatmul.mubr.f32.gmra.mxu0 %v707
        %v778 = vpop.f32.mrf.mxu0
        %v779 = vadd.f32 %v704, %v778
        %v780 = vpop.f32.mrf.mxu0
        %781 = vmatprep.mubr.f32.mxu0 0.0
        %782 = vmatmul.mubr.f32.gmra.mxu0 %v710
        %v783 = vpop.f32.mrf.mxu0
        %v784 = vadd.f32 %v704, %v783
        %v785 = vpop.f32.mrf.mxu0
        %786 = vdwg.mxu0
        %s787 = sld [smem:[#allocation2]]
        %s788 = sld [smem:[#allocation2 + $0x1]]
        %s789 = sadd.f32 %s788, 1.0
        %v790 = vstv %s789
        %v791 = vmul.f32 %v790, %v400
        %v792 = vmul.f32 %v790, %v401
        %v793 = vstv %s787
        %v794 = vmul.f32 %v793, %v779
        %v795 = vmul.f32 %v793, %v784
        %v796 = vadd.f32 %v791, %v794
        %v797 = vadd.f32 %v792, %v795
        %798 = vadd.xlane.f32.xlu0 %v796
        %v799 = vpop.xlane.xlu0 %798
        %800 = vadd.xlane.f32.xlu0 %v797
        %v801 = vpop.xlane.xlu0 %800
        %v802 = vmul.f32 %v799, 0.0078125
        %v803 = vmul.f32 %v801, 0.0078125
        %v804 = vsub.f32 %v796, %v802
        %v805 = vsub.f32 %v797, %v803
        %v806 = vmul.f32 %v804, %v804
        %v807 = vmul.f32 %v805, %v805
        %808 = vadd.xlane.f32.xlu0 %v806
        %v809 = vpop.xlane.xlu0 %808
        %810 = vadd.xlane.f32.xlu0 %v807
        %v811 = vpop.xlane.xlu0 %810
        %v812 = vmul.f32 %v809, 0.0078125
        %v813 = vmul.f32 %v811, 0.0078125
        %v814 = vadd.f32 %v812, 1e-05
        %v815 = vadd.f32 %v813, 1e-05
        %v816 = vrsqrt.pop %v814
        %v817 = vrsqrt.pop %v815
        %v818 = vmul.f32 %v804, %v816
        %v819 = vmul.f32 %v805, %v817
        %v820 = vld [vmem:[%s7] sm:$0x1]
        %v822 = vlaneseq
        %v823 = vshrl.u32 %v822, 7
        %v824 = vsub.s32 0, %v823
        %v825 = vrot.slane %v820, %v824
        %v827 = vmul.f32 %v818, %v825
        %v828 = vmul.f32 %v819, %v825
        %v829 = vld [vmem:[%s8] sm:$0x1]
        %v831 = vlaneseq
        %v832 = vshrl.u32 %v831, 7
        %v833 = vsub.s32 0, %v832
        %v834 = vrot.slane %v829, %v833
        %v836 = vadd.f32 %v827, %v834
        %v837 = vadd.f32 %v828, %v834
        %838 = vst [vmem:[%s379] sm:$0xff] %v836
        %839 = vst [vmem:[%s379 + $0x8] sm:$0xff] %v837
        %s840 = sand.u32 %s248, 1
        %s841 = scalar_lea.sflag [#allocation3], %s840
        %s842 = sand.u32 %s248, 1
        %s843 = smul.addr %s842, 16
        %s844 = scalar_lea.vmem [#allocation5], %s843
        // Predicated region
        $region65: #{tpu_custom_call.1} parent=59 // pred_check
          %p845 = pneg %p258
        $region66: #{tpu_custom_call.1} parent=59 // pred_check_branch
          %847 = sbr.rel (%p845) target = $region68
        $region67: #{tpu_custom_call.1} parent=59 // pred_region
          %s848 = smul.u32 2, %s25
          %s849 = ssub.s32 3, %s848
          %p850 = scmp.lt.s32.totalorder %s849, 2
          %s851 = scalar_select %p850, %s849, 2
          %s852 = smul.u32 128, %s851
          %s854 = ssub.s32 256, %s852
          %855 = vsyncadd %s841, %s854
          %p856 = scmp.ne.s32.totalorder 0, %s852
          %s857 = smul.addr %s848, 128
          %s858 = scalar_lea.hbm %s10, %s857
          %s859 = smul.u32 8, %s851
          %s860 = sshll.u32 %s844, 4
          %s861 = int_to_ptr.vmem [resolvable:$true] %s860
          %s862 = sshll.u32 %s859, 4
          %866 = dma.vmem_to_hbm [thread:$0]  (%p856), %s861, %s862, %s858, %s841, 128, 128, 8
        $region68: #{tpu_custom_call.1} parent=59 // pred_fallthru
          _
      $region60: #{tpu_custom_call.1} parent=5 // pred_fallthru
        _
      %p867 = scmp.le.s32.totalorder 2, %s20
      // Predicated region
      $region69: #{tpu_custom_call.1} parent=5 // pred_check
        %p868 = pneg %p867
      $region70: #{tpu_custom_call.1} parent=5 // pred_check_branch
        %870 = sbr.rel (%p868) target = $region72
      $region71: #{tpu_custom_call.1} parent=5 // pred_region
        %s871 = ssub.s32 %s20, 2
        // Predicated region
        $region73: #{tpu_custom_call.1} parent=71 // pred_check
          %p872 = pneg %p264
        $region74: #{tpu_custom_call.1} parent=71 // pred_check_branch
          %874 = sbr.rel (%p872) target = $region76
        $region75: #{tpu_custom_call.1} parent=71 // pred_region
          %s875 = sand.u32 %s249, 1
          %s876 = scalar_lea.sflag [#allocation3], %s875
          %s877 = sand.u32 %s249, 1
          %s878 = smul.addr %s877, 16
          %s879 = scalar_lea.vmem [#allocation5], %s878
          %880 = dma.done %s876, 256
        $region76: #{tpu_custom_call.1} parent=71 // pred_fallthru
          _
      $region72: #{tpu_custom_call.1} parent=5 // pred_fallthru
        _
    $region6: #{tpu_custom_call.1} parent=1 // loop_footer
      %s24 = sadd.s32 1, %s20
    $region7: #{tpu_custom_call.1} parent=1 // loop_footer_branch
      %19 = sbr.rel target = $region3
    $region8: #{tpu_custom_call.1} parent=1 // loop_exit
      _
    %881 = vsyncpa [#allocation3], 1
    %s882 = scalar_lea.sflag [#allocation3], 1
    %883 = vsyncpa %s882, 1
    %884 = vsyncpa [#allocation4], 1
    %s885 = scalar_lea.sflag [#allocation4], 1
    %886 = vsyncpa %s885, 1

</llo_original>
